<compile_context>
chip_gen: v7x
topology: tpu7x:2x2x1
jax: 0.10.0
libtpu: 0.0.40
codegen_flags: <defaults>
</compile_context>

<pallas_src>
import jax
import jax.numpy as jnp
from jax.experimental import pallas as pl
from jax.experimental.pallas import tpu as pltpu


# ----------------------------- small helpers --------------------------------

def _pair(v):
    if isinstance(v, (tuple, list)):
        assert len(v) == 2
        return int(v[0]), int(v[1])
    return int(v), int(v)


def _pool_out_size(L, k, s, p, d, ceil_mode):
    """PyTorch MaxPool2d output-size formula."""
    eff = d * (k - 1) + 1
    num = L + 2 * p - eff
    if ceil_mode:
        o = -(-num // s) + 1
        if (o - 1) * s >= L + p:   # window must start inside input + left pad
            o -= 1
    else:
        o = num // s + 1
    return o


def _pad_min(dtype):
    dtype = jnp.dtype(dtype)
    if jnp.issubdtype(dtype, jnp.floating):
        return float("-inf")
    return int(jnp.iinfo(dtype).min)


def _extract_window_patches(t, kh, kw, sh, sw, ph, pw, dh, dw, OH, OW, pad_value):
    """NCHW -> (N, K2*OH, OW, C) channels-last window patches (pure XLA)."""
    N, C, H, W = t.shape
    need_h = (OH - 1) * sh + dh * (kh - 1) + 1
    need_w = (OW - 1) * sw + dw * (kw - 1) + 1
    pad_h_hi = max(need_h - (H + ph), 0)
    pad_w_hi = max(need_w - (W + pw), 0)
    if ph or pw or pad_h_hi or pad_w_hi:
        t = jnp.pad(t, ((0, 0), (0, 0), (ph, pad_h_hi), (pw, pad_w_hi)),
                    constant_values=pad_value)
    slabs = []
    for i in range(kh):
        for j in range(kw):
            h0 = i * dh
            w0 = j * dw
            sl = t[:, :, h0:h0 + (OH - 1) * sh + 1:sh,
                         w0:w0 + (OW - 1) * sw + 1:sw]      # (N, C, OH, OW)
            slabs.append(sl)
    p = jnp.stack(slabs, axis=1)                             # (N, K2, C, OH, OW)
    p = jnp.transpose(p, (0, 1, 3, 4, 2))                    # (N, K2, OH, OW, C)
    return p.reshape(N, kh * kw * OH, OW, C)                 # fold K2 into rows


def _channel_tile(C, K2, OH, OW, itemsize, budget_bytes=4 * 1024 * 1024):
    """Largest channel tile (multiple of 128 dividing C, or full C) under budget."""
    if C % 128 != 0 or C <= 128:
        return C
    ct = C
    while ct > 128 and K2 * OH * OW * ct * itemsize > budget_bytes:
        nxt = ct // 2
        if nxt % 128 != 0 or C % nxt != 0:
            break
        ct = nxt
    return ct


# ------------------------------- the kernel ---------------------------------

def _make_kernel(K2, OH):
    def kernel(xp_ref, sp_ref, ox_ref, os_ref):
        # xp_ref / sp_ref: (1, K2*OH, OW, Ct);  ox_ref / os_ref: (1, OH, OW, Ct)
        best_x = xp_ref[0, 0:OH]            # window element 0
        best_s = sp_ref[0, 0:OH]
        for j in range(1, K2):              # static, small (k*k) unrolled loop
            xv = xp_ref[0, j * OH:(j + 1) * OH]
            sv = sp_ref[0, j * OH:(j + 1) * OH]
            m = xv > best_x                 # strict '>' => first-occurrence ties
            best_x = jnp.where(m, xv, best_x)
            best_s = jnp.where(m, sv, best_s)
        ox_ref[0] = best_x
        os_ref[0] = best_s
    return kernel


def s_maxpool2d(x, xS, kernel_size, stride=None, padding=0, dilation=1,
                ceil_mode=False):
    """Pallas implementation of SMaxpool2D.forward((x, xS)) — NCHW in/out."""
    assert x.shape == xS.shape
    kh, kw = _pair(kernel_size)
    sh, sw = _pair(stride if stride is not None else kernel_size)
    ph, pw = _pair(padding)
    dh, dw = _pair(dilation)

    N, C, H, W = x.shape
    OH = _pool_out_size(H, kh, sh, ph, dh, ceil_mode)
    OW = _pool_out_size(W, kw, sw, pw, dw, ceil_mode)
    K2 = kh * kw

    # Wrapper-side layout plumbing: channels-last + window axis, one XLA pass.
    xp = _extract_window_patches(x, kh, kw, sh, sw, ph, pw, dh, dw, OH, OW,
                                 pad_value=_pad_min(x.dtype))
    sp = _extract_window_patches(xS, kh, kw, sh, sw, ph, pw, dh, dw, OH, OW,
                                 pad_value=0)

    itemsize = jnp.dtype(x.dtype).itemsize
    Ct = _channel_tile(C, K2, OH, OW, itemsize)
    grid = (N, C // Ct)

    in_spec = pl.BlockSpec((1, K2 * OH, OW, Ct), lambda n, c: (n, 0, 0, c))
    out_spec = pl.BlockSpec((1, OH, OW, Ct), lambda n, c: (n, 0, 0, c))

    out_bytes = N * OH * OW * C * itemsize
    cost = pl.CostEstimate(
        flops=3 * N * K2 * OH * OW * C,          # compare + 2 selects per elem
        transcendentals=0,
        bytes_accessed=xp.size * itemsize + sp.size * jnp.dtype(xS.dtype).itemsize
                       + 2 * out_bytes,
    )

    out_x_nhwc, out_s_nhwc = pl.pallas_call(
        _make_kernel(K2, OH),
        out_shape=(
            jax.ShapeDtypeStruct((N, OH, OW, C), x.dtype),
            jax.ShapeDtypeStruct((N, OH, OW, C), xS.dtype),
        ),
        grid_spec=pl.GridSpec(
            grid=grid,
            in_specs=[in_spec, in_spec],
            out_specs=[out_spec, out_spec],
        ),
        compiler_params=pltpu.CompilerParams(
            dimension_semantics=("parallel", "parallel"),
        ),
        cost_estimate=cost,
    )(xp, sp)

    # back to NCHW to match the PyTorch module's interface
    out_x = jnp.transpose(out_x_nhwc, (0, 3, 1, 2))
    out_s = jnp.transpose(out_s_nhwc, (0, 3, 1, 2))
    return out_x, out_s


# --------------------------- pure-JAX reference ------------------------------

def _reference_smaxpool2d(x, xS, kernel_size, stride=None, padding=0,
                          dilation=1, ceil_mode=False):
    """Independent reference: max pool x, gather xS at the argmax indices."""
    kh, kw = _pair(kernel_size)
    sh, sw = _pair(stride if stride is not None else kernel_size)
    ph, pw = _pair(padding)
    dh, dw = _pair(dilation)
    N, C, H, W = x.shape
    OH = _pool_out_size(H, kh, sh, ph, dh, ceil_mode)
    OW = _pool_out_size(W, kw, sw, pw, dw, ceil_mode)
    neg = _pad_min(x.dtype)

    rows_x, rows_s = [], []
    for oh in range(OH):
        cols_x, cols_s = [], []
        for ow in range(OW):
            vals_x, vals_s = [], []
            for i in range(kh):
                for j in range(kw):
                    ih = oh * sh - ph + i * dh
                    iw = ow * sw - pw + j * dw
                    if 0 <= ih < H and 0 <= iw < W:
                        vals_x.append(x[:, :, ih, iw])
                        vals_s.append(xS[:, :, ih, iw])
                    else:
                        vals_x.append(jnp.full((N, C), neg, x.dtype))
                        vals_s.append(jnp.zeros((N, C), xS.dtype))
            vx = jnp.stack(vals_x, axis=-1)           # (N, C, K2)
            vs = jnp.stack(vals_s, axis=-1)
            idx = jnp.argmax(vx, axis=-1)             # first max (PyTorch order)
            cols_x.append(jnp.max(vx, axis=-1))
            cols_s.append(jnp.take_along_axis(vs, idx[..., None], axis=-1)[..., 0])
        rows_x.append(jnp.stack(cols_x, axis=-1))     # (N, C, OW)
        rows_s.append(jnp.stack(cols_s, axis=-1))
    return jnp.stack(rows_x, axis=-2), jnp.stack(rows_s, axis=-2)


# --------------------------------- main --------------------------------------

if __name__ == "__main__":
    key = jax.random.PRNGKey(0)
    k1, k2 = jax.random.split(key)

    # Small shapes consistent with the module: NCHW, batch=2, channels=4, 16x16.
    N, C, H, W = 2, 4, 16, 16
    x = jax.random.normal(k1, (N, C, H, W), dtype=jnp.float32)
    xS = jax.random.normal(k2, (N, C, H, W), dtype=jnp.float32)

    # Config 1: the typical SMaxpool2D(2) — kernel 2, stride 2, no padding.
    out_x, out_xS = s_maxpool2d(x, xS, kernel_size=2)
    out_x = jax.block_until_ready(out_x)
    out_xS = jax.block_until_ready(out_xS)
    ref_x, ref_xS = _reference_smaxpool2d(x, xS, kernel_size=2)
    assert out_x.shape == (N, C, 8, 8) and out_xS.shape == (N, C, 8, 8)
    assert bool(jnp.array_equal(out_x, ref_x))
    assert bool(jnp.array_equal(out_xS, ref_xS))

    # Config 2: overlapping windows with padding (k=3, s=2, p=1).
    out_x2, out_xS2 = s_maxpool2d(x, xS, kernel_size=3, stride=2, padding=1)
    out_x2 = jax.block_until_ready(out_x2)
    out_xS2 = jax.block_until_ready(out_xS2)
    ref_x2, ref_xS2 = _reference_smaxpool2d(x, xS, kernel_size=3, stride=2,
                                            padding=1)
    assert bool(jnp.array_equal(out_x2, ref_x2))
    assert bool(jnp.array_equal(out_xS2, ref_xS2))

    print("KERNEL_OK")
</pallas_src>

<mosaic_0001>
module attributes {stable_mosaic.version = 11 : i64} {
  func.func @kernel(%arg0: i32, %arg1: i32, %arg2: memref<1x32x8x4xf32, #tpu.memory_space<vmem>>, %arg3: memref<1x32x8x4xf32, #tpu.memory_space<vmem>>, %arg4: memref<1x8x8x4xf32, #tpu.memory_space<vmem>>, %arg5: memref<1x8x8x4xf32, #tpu.memory_space<vmem>>) attributes {dimension_semantics = [#tpu.dimension_semantics<parallel>, #tpu.dimension_semantics<parallel>], iteration_bounds = array<i64: 2, 1>, scalar_prefetch = 0 : i64, scratch_operands = 0 : i64, tpu.core_type = #tpu.core_type<tc>, window_params = [{transform_indices = @transform_0, window_bounds = array<i64: 1, 32, 8, 4>}, {transform_indices = @transform_1, window_bounds = array<i64: 1, 32, 8, 4>}, {transform_indices = @transform_2, window_bounds = array<i64: 1, 8, 8, 4>}, {transform_indices = @transform_3, window_bounds = array<i64: 1, 8, 8, 4>}]} {
    %c0 = arith.constant 0 : index
    %c0_0 = arith.constant 0 : index
    %c0_1 = arith.constant 0 : index
    %c0_2 = arith.constant 0 : index
    %0 = vector.load %arg2[%c0, %c0_0, %c0_1, %c0_2] : memref<1x32x8x4xf32, #tpu.memory_space<vmem>>, vector<1x8x8x4xf32>
    %1 = vector.shape_cast %0 : vector<1x8x8x4xf32> to vector<8x8x4xf32>
    %c0_3 = arith.constant 0 : index
    %c0_4 = arith.constant 0 : index
    %c0_5 = arith.constant 0 : index
    %c0_6 = arith.constant 0 : index
    %2 = vector.load %arg3[%c0_3, %c0_4, %c0_5, %c0_6] : memref<1x32x8x4xf32, #tpu.memory_space<vmem>>, vector<1x8x8x4xf32>
    %3 = vector.shape_cast %2 : vector<1x8x8x4xf32> to vector<8x8x4xf32>
    %c0_7 = arith.constant 0 : index
    %c8 = arith.constant 8 : index
    %c0_8 = arith.constant 0 : index
    %c0_9 = arith.constant 0 : index
    %4 = vector.load %arg2[%c0_7, %c8, %c0_8, %c0_9] : memref<1x32x8x4xf32, #tpu.memory_space<vmem>>, vector<1x8x8x4xf32>
    %5 = vector.shape_cast %4 : vector<1x8x8x4xf32> to vector<8x8x4xf32>
    %c0_10 = arith.constant 0 : index
    %c8_11 = arith.constant 8 : index
    %c0_12 = arith.constant 0 : index
    %c0_13 = arith.constant 0 : index
    %6 = vector.load %arg3[%c0_10, %c8_11, %c0_12, %c0_13] : memref<1x32x8x4xf32, #tpu.memory_space<vmem>>, vector<1x8x8x4xf32>
    %7 = vector.shape_cast %6 : vector<1x8x8x4xf32> to vector<8x8x4xf32>
    %8 = arith.cmpf ogt, %5, %1 : vector<8x8x4xf32>
    %9 = arith.select %8, %5, %1 : vector<8x8x4xi1>, vector<8x8x4xf32>
    %10 = arith.select %8, %7, %3 : vector<8x8x4xi1>, vector<8x8x4xf32>
    %c0_14 = arith.constant 0 : index
    %c16 = arith.constant 16 : index
    %c0_15 = arith.constant 0 : index
    %c0_16 = arith.constant 0 : index
    %11 = vector.load %arg2[%c0_14, %c16, %c0_15, %c0_16] : memref<1x32x8x4xf32, #tpu.memory_space<vmem>>, vector<1x8x8x4xf32>
    %12 = vector.shape_cast %11 : vector<1x8x8x4xf32> to vector<8x8x4xf32>
    %c0_17 = arith.constant 0 : index
    %c16_18 = arith.constant 16 : index
    %c0_19 = arith.constant 0 : index
    %c0_20 = arith.constant 0 : index
    %13 = vector.load %arg3[%c0_17, %c16_18, %c0_19, %c0_20] : memref<1x32x8x4xf32, #tpu.memory_space<vmem>>, vector<1x8x8x4xf32>
    %14 = vector.shape_cast %13 : vector<1x8x8x4xf32> to vector<8x8x4xf32>
    %15 = arith.cmpf ogt, %12, %9 : vector<8x8x4xf32>
    %16 = arith.select %15, %12, %9 : vector<8x8x4xi1>, vector<8x8x4xf32>
    %17 = arith.select %15, %14, %10 : vector<8x8x4xi1>, vector<8x8x4xf32>
    %c0_21 = arith.constant 0 : index
    %c24 = arith.constant 24 : index
    %c0_22 = arith.constant 0 : index
    %c0_23 = arith.constant 0 : index
    %18 = vector.load %arg2[%c0_21, %c24, %c0_22, %c0_23] : memref<1x32x8x4xf32, #tpu.memory_space<vmem>>, vector<1x8x8x4xf32>
    %19 = vector.shape_cast %18 : vector<1x8x8x4xf32> to vector<8x8x4xf32>
    %c0_24 = arith.constant 0 : index
    %c24_25 = arith.constant 24 : index
    %c0_26 = arith.constant 0 : index
    %c0_27 = arith.constant 0 : index
    %20 = vector.load %arg3[%c0_24, %c24_25, %c0_26, %c0_27] : memref<1x32x8x4xf32, #tpu.memory_space<vmem>>, vector<1x8x8x4xf32>
    %21 = vector.shape_cast %20 : vector<1x8x8x4xf32> to vector<8x8x4xf32>
    %22 = arith.cmpf ogt, %19, %16 : vector<8x8x4xf32>
    %23 = arith.select %22, %19, %16 : vector<8x8x4xi1>, vector<8x8x4xf32>
    %24 = arith.select %22, %21, %17 : vector<8x8x4xi1>, vector<8x8x4xf32>
    %c0_28 = arith.constant 0 : index
    %c0_29 = arith.constant 0 : index
    %c0_30 = arith.constant 0 : index
    %c0_31 = arith.constant 0 : index
    %25 = vector.load %arg4[%c0_28, %c0_29, %c0_30, %c0_31] : memref<1x8x8x4xf32, #tpu.memory_space<vmem>>, vector<1x8x8x4xf32>
    %26 = vector.shape_cast %25 : vector<1x8x8x4xf32> to vector<8x8x4xf32>
    %27 = vector.shape_cast %23 : vector<8x8x4xf32> to vector<1x8x8x4xf32>
    tpu.vector_store %arg4[%c0_28, %c0_29, %c0_30, %c0_31], %27 {strides = array<i32>} : memref<1x8x8x4xf32, #tpu.memory_space<vmem>>, vector<1x8x8x4xf32>,
    %c0_32 = arith.constant 0 : index
    %c0_33 = arith.constant 0 : index
    %c0_34 = arith.constant 0 : index
    %c0_35 = arith.constant 0 : index
    %28 = vector.load %arg5[%c0_32, %c0_33, %c0_34, %c0_35] : memref<1x8x8x4xf32, #tpu.memory_space<vmem>>, vector<1x8x8x4xf32>
    %29 = vector.shape_cast %28 : vector<1x8x8x4xf32> to vector<8x8x4xf32>
    %30 = vector.shape_cast %24 : vector<8x8x4xf32> to vector<1x8x8x4xf32>
    tpu.vector_store %arg5[%c0_32, %c0_33, %c0_34, %c0_35], %30 {strides = array<i32>} : memref<1x8x8x4xf32, #tpu.memory_space<vmem>>, vector<1x8x8x4xf32>,
    return
  }
  func.func @transform_0(%arg0: i32, %arg1: i32) -> (i32, i32, i32, i32) {
    %c0_i32 = arith.constant 0 : i32
    %c0_i32_0 = arith.constant 0 : i32
    %c0_i32_1 = arith.constant 0 : i32
    return %arg0, %c0_i32, %c0_i32_0, %arg1 : i32, i32, i32, i32
  }
  func.func @transform_1(%arg0: i32, %arg1: i32) -> (i32, i32, i32, i32) {
    %c0_i32 = arith.constant 0 : i32
    %c0_i32_0 = arith.constant 0 : i32
    %c0_i32_1 = arith.constant 0 : i32
    return %arg0, %c0_i32, %c0_i32_0, %arg1 : i32, i32, i32, i32
  }
  func.func @transform_2(%arg0: i32, %arg1: i32) -> (i32, i32, i32, i32) {
    %c0_i32 = arith.constant 0 : i32
    %c0_i32_0 = arith.constant 0 : i32
    %c0_i32_1 = arith.constant 0 : i32
    return %arg0, %c0_i32, %c0_i32_0, %arg1 : i32, i32, i32, i32
  }
  func.func @transform_3(%arg0: i32, %arg1: i32) -> (i32, i32, i32, i32) {
    %c0_i32 = arith.constant 0 : i32
    %c0_i32_0 = arith.constant 0 : i32
    %c0_i32_1 = arith.constant 0 : i32
    return %arg0, %c0_i32, %c0_i32_0, %arg1 : i32, i32, i32, i32
  }
}

</mosaic_0001>

<llo_original>
// kernel: tpu_custom_call.1
$region0: #{tpu_custom_call.1}
  #allocation0 [shape = 'u32[]', space=smem, size = 0x4, offset = 0x4, fixed_abs, tag = 'smem constant byte address 0x4 - core index']
  #allocation1 [shape = 'u32[144,128]{1,0:T(1,128)}', space=vmem, size = 0x12000, scoped, tag = 'internal scratch']
  %s0 = inlined_call_operand.vmem [shape: f32[2,32,8,4], index: 0, kind: input, shape index: {}]
  %s1 = inlined_call_operand.vmem [shape: f32[2,32,8,4], index: 1, kind: input, shape index: {}]
  %s2 = inlined_call_operand.vmem [shape: f32[2,8,8,4], index: 2, kind: output, shape index: {0}]
  %s3 = inlined_call_operand.vmem [shape: f32[2,8,8,4], index: 3, kind: output, shape index: {1}]
  %4 = xla_tuple %s2, %s3
  %s5 = sld [smem:[#allocation0]]
  $region49: #{tpu_custom_call.1} parent=0
    _
  %s7 = ssub.s32 1, %s5
  %s8 = scalar_select 0, %s7, %s5
  loop: start=0, step=1, limit=4
  $region2: #{tpu_custom_call.1} parent=0 // loop_pre_header
    _
  $region3: #{tpu_custom_call.1} parent=0 // loop_header
    %s10 = sphi 0, %s14
    %p11 = scmp.ge.s32.totalorder %s10, 4
    %s17 = sphi 0, %s29
    %s18 = sphi 0, %s25
    %s19 = sphi 0, %s17
    %s20 = sphi 0, %s18
    %s21 = sphi 0, %s19
    %s22 = sphi 0, %s20
    %s34 = sphi 0, %s36
    %s37 = sphi 0, %s34
    %s38 = sphi 0, %s37
    %s54 = sphi 0, %s38
    %s62 = sphi 0, %s64
    %s65 = sphi 0, %s62
    %s66 = sphi 0, %s65
    %s82 = sphi 0, %s66
    %s90 = sphi 0, %s92
    %s93 = sphi 0, %s90
    %s94 = sphi 0, %s93
    %s110 = sphi 0, %s94
    %s118 = sphi 0, %s120
    %s121 = sphi 0, %s118
    %s122 = sphi 0, %s121
    %s138 = sphi 0, %s122
  $region4: #{tpu_custom_call.1} parent=0 // loop_header_branch
    %13 = sbr.rel (%p11) target = $region8
  $region5: #{tpu_custom_call.1} parent=0 // loop_body
    %s15 = ssub.s32 %s10, 1
    %s16 = ssub.s32 %s10, 2
    %s23 = sadd.s32 1, %s18
    %p24 = scmp.ge.s32.totalorder %s23, 1
    %s25 = scalar_select %p24, 0, %s23
    %s26 = sadd.s32 1, %s17
    %s27 = scalar_select %p24, %s26, %s17
    %p28 = scmp.ge.s32.totalorder %s27, 2
    %s29 = scalar_select %p28, 0, %s27
    %s30 = ssub.s32 %s17, %s29
    %s31 = ssub.s32 %s18, %s25
    %s32 = sor.u32 %s30, %s31
    %p33 = scmp.eq.s32.totalorder %s32, 0
    %s35 = sadd.s32 %s34, 1
    %s36 = scalar_select %p33, %s34, %s35
    %p39 = pneg %p33
    %p40 = scmp.eq.s32.totalorder %s10, 1
    %p41 = por %p39, %p40
    %p42 = scmp.ne.s32.totalorder %s34, %s37
    %p43 = scmp.eq.s32.totalorder %s10, 0
    %p44 = por %p42, %p43
    %p45 = scmp.ne.s32.totalorder %s34, %s37
    %p46 = scmp.eq.s32.totalorder %s15, 1
    %p47 = por %p45, %p46
    %p48 = scmp.ne.s32.totalorder %s37, %s38
    %p49 = scmp.eq.s32.totalorder %s15, 0
    %p50 = por %p48, %p49
    %p51 = scmp.ne.s32.totalorder %s37, %s38
    %p52 = scmp.eq.s32.totalorder %s16, 1
    %p53 = por %p51, %p52
    %p55 = scmp.ne.s32.totalorder %s38, %s54
    %p56 = scmp.eq.s32.totalorder %s16, 0
    %p57 = por %p55, %p56
    %s58 = ssub.s32 %s17, %s29
    %s59 = ssub.s32 %s18, %s25
    %s60 = sor.u32 %s58, %s59
    %p61 = scmp.eq.s32.totalorder %s60, 0
    %s63 = sadd.s32 %s62, 1
    %s64 = scalar_select %p61, %s62, %s63
    %p67 = pneg %p61
    %p68 = scmp.eq.s32.totalorder %s10, 1
    %p69 = por %p67, %p68
    %p70 = scmp.ne.s32.totalorder %s62, %s65
    %p71 = scmp.eq.s32.totalorder %s10, 0
    %p72 = por %p70, %p71
    %p73 = scmp.ne.s32.totalorder %s62, %s65
    %p74 = scmp.eq.s32.totalorder %s15, 1
    %p75 = por %p73, %p74
    %p76 = scmp.ne.s32.totalorder %s65, %s66
    %p77 = scmp.eq.s32.totalorder %s15, 0
    %p78 = por %p76, %p77
    %p79 = scmp.ne.s32.totalorder %s65, %s66
    %p80 = scmp.eq.s32.totalorder %s16, 1
    %p81 = por %p79, %p80
    %p83 = scmp.ne.s32.totalorder %s66, %s82
    %p84 = scmp.eq.s32.totalorder %s16, 0
    %p85 = por %p83, %p84
    %s86 = ssub.s32 %s17, %s29
    %s87 = ssub.s32 %s18, %s25
    %s88 = sor.u32 %s86, %s87
    %p89 = scmp.eq.s32.totalorder %s88, 0
    %s91 = sadd.s32 %s90, 1
    %s92 = scalar_select %p89, %s90, %s91
    %p95 = pneg %p89
    %p96 = scmp.eq.s32.totalorder %s10, 1
    %p97 = por %p95, %p96
    %p98 = scmp.ne.s32.totalorder %s90, %s93
    %p99 = scmp.eq.s32.totalorder %s10, 0
    %p100 = por %p98, %p99
    %p101 = scmp.ne.s32.totalorder %s90, %s93
    %p102 = scmp.eq.s32.totalorder %s15, 1
    %p103 = por %p101, %p102
    %p104 = scmp.ne.s32.totalorder %s93, %s94
    %p105 = scmp.eq.s32.totalorder %s15, 0
    %p106 = por %p104, %p105
    %p107 = scmp.ne.s32.totalorder %s93, %s94
    %p108 = scmp.eq.s32.totalorder %s16, 1
    %p109 = por %p107, %p108
    %p111 = scmp.ne.s32.totalorder %s94, %s110
    %p112 = scmp.eq.s32.totalorder %s16, 0
    %p113 = por %p111, %p112
    %s114 = ssub.s32 %s17, %s29
    %s115 = ssub.s32 %s18, %s25
    %s116 = sor.u32 %s114, %s115
    %p117 = scmp.eq.s32.totalorder %s116, 0
    %s119 = sadd.s32 %s118, 1
    %s120 = scalar_select %p117, %s118, %s119
    %p123 = pneg %p117
    %p124 = scmp.eq.s32.totalorder %s10, 1
    %p125 = por %p123, %p124
    %p126 = scmp.ne.s32.totalorder %s118, %s121
    %p127 = scmp.eq.s32.totalorder %s10, 0
    %p128 = por %p126, %p127
    %p129 = scmp.ne.s32.totalorder %s118, %s121
    %p130 = scmp.eq.s32.totalorder %s15, 1
    %p131 = por %p129, %p130
    %p132 = scmp.ne.s32.totalorder %s121, %s122
    %p133 = scmp.eq.s32.totalorder %s15, 0
    %p134 = por %p132, %p133
    %p135 = scmp.ne.s32.totalorder %s121, %s122
    %p136 = scmp.eq.s32.totalorder %s16, 1
    %p137 = por %p135, %p136
    %p139 = scmp.ne.s32.totalorder %s122, %s138
    %p140 = scmp.eq.s32.totalorder %s16, 0
    %p141 = por %p139, %p140
    %p142 = scmp.le.s32.totalorder 1, %s10
    %p143 = scmp.lt.s32.totalorder %s10, 3
    %p144 = pnand %p142, %p143
    %p145 = pneg %p144
    // Predicated region
    $region9: #{tpu_custom_call.1} parent=5 // pred_check
      _
    $region10: #{tpu_custom_call.1} parent=5 // pred_check_branch
      %147 = sbr.rel (%p144) target = $region12
    $region11: #{tpu_custom_call.1} parent=5 // pred_region
      %s148 = ssub.s32 %s10, 1
    $region12: #{tpu_custom_call.1} parent=5 // pred_fallthru
      _
    %p149 = scmp.lt.s32.totalorder %s10, 2
    // Predicated region
    $region13: #{tpu_custom_call.1} parent=5 // pred_check
      %p150 = pneg %p149
    $region14: #{tpu_custom_call.1} parent=5 // pred_check_branch
      %152 = sbr.rel (%p150) target = $region16
    $region15: #{tpu_custom_call.1} parent=5 // pred_region
      // Predicated region
      $region17: #{tpu_custom_call.1} parent=15 // pred_check
        %p153 = pneg %p44
      $region18: #{tpu_custom_call.1} parent=15 // pred_check_branch
        %155 = sbr.rel (%p153) target = $region20
      $region19: #{tpu_custom_call.1} parent=15 // pred_region
        %p156 = scmp.lt.s32.totalorder %s17, 1
        %s157 = scalar_select %p156, %s17, 1
        %p158 = scmp.lt.s32.totalorder %s18, 0
        %s159 = scalar_select %p158, %s18, 0
        %s160 = smul.addr %s157, 32
        %s161 = sadd.s32 %s159, %s160
        %s162 = smul.addr %s161, 8
        %s163 = scalar_lea.vmem %s0, %s162
      $region20: #{tpu_custom_call.1} parent=15 // pred_fallthru
        _
      // Predicated region
      $region21: #{tpu_custom_call.1} parent=15 // pred_check
        %p164 = pneg %p72
      $region22: #{tpu_custom_call.1} parent=15 // pred_check_branch
        %166 = sbr.rel (%p164) target = $region24
      $region23: #{tpu_custom_call.1} parent=15 // pred_region
        %p167 = scmp.lt.s32.totalorder %s17, 1
        %s168 = scalar_select %p167, %s17, 1
        %p169 = scmp.lt.s32.totalorder %s18, 0
        %s170 = scalar_select %p169, %s18, 0
        %s171 = smul.addr %s168, 32
        %s172 = sadd.s32 %s170, %s171
        %s173 = smul.addr %s172, 8
        %s174 = scalar_lea.vmem %s1, %s173
      $region24: #{tpu_custom_call.1} parent=15 // pred_fallthru
        _
    $region16: #{tpu_custom_call.1} parent=5 // pred_fallthru
      _
    %p175 = scmp.le.s32.totalorder 1, %s10
    %p176 = scmp.lt.s32.totalorder %s10, 3
    %p177 = pnand %p175, %p176
    %p178 = pneg %p177
    // Predicated region
    $region25: #{tpu_custom_call.1} parent=5 // pred_check
      _
    $region26: #{tpu_custom_call.1} parent=5 // pred_check_branch
      %180 = sbr.rel (%p177) target = $region28
    $region27: #{tpu_custom_call.1} parent=5 // pred_region
      %s181 = ssub.s32 %s10, 1
      %p182 = scmp.lt.s32.totalorder %s19, 1
      %s183 = scalar_select %p182, %s19, 1
      %p184 = scmp.lt.s32.totalorder %s20, 0
      %s185 = scalar_select %p184, %s20, 0
      %s186 = smul.addr %s183, 32
      %s187 = sadd.s32 %s185, %s186
      %s188 = smul.addr %s187, 8
      %s189 = scalar_lea.vmem %s0, %s188
      %p190 = pneg %p50
      %p191 = pneg %p47
      %p192 = scmp.lt.s32.totalorder %s19, 1
      %s193 = scalar_select %p192, %s19, 1
      %p194 = scmp.lt.s32.totalorder %s20, 0
      %s195 = scalar_select %p194, %s20, 0
      %s196 = smul.addr %s193, 32
      %s197 = sadd.s32 %s195, %s196
      %s198 = smul.addr %s197, 8
      %s199 = scalar_lea.vmem %s1, %s198
      %p200 = pneg %p78
      %p201 = pneg %p75
      %p202 = pneg %p106
      %p203 = pneg %p103
      %p204 = scmp.lt.s32.totalorder %s19, 1
      %s205 = scalar_select %p204, %s19, 1
      %p206 = scmp.lt.s32.totalorder %s20, 0
      %s207 = scalar_select %p206, %s20, 0
      %s208 = smul.addr %s205, 8
      %s209 = sadd.s32 %s207, %s208
      %s210 = smul.addr %s209, 8
      %s211 = scalar_lea.vmem %s2, %s210
      %p212 = pneg %p134
      %p213 = pneg %p131
      %p214 = scmp.lt.s32.totalorder %s19, 1
      %s215 = scalar_select %p214, %s19, 1
      %p216 = scmp.lt.s32.totalorder %s20, 0
      %s217 = scalar_select %p216, %s20, 0
      %s218 = smul.addr %s215, 8
      %s219 = sadd.s32 %s217, %s218
      %s220 = smul.addr %s219, 8
      %s221 = scalar_lea.vmem %s3, %s220
      %p222 = scmp.lt.s32.totalorder %s19, 1
      %s223 = scalar_select %p222, %s19, 1
      %p224 = scmp.lt.s32.totalorder %s20, 0
      %s225 = scalar_select %p224, %s20, 0
      %s226 = smul.addr %s223, 32
      %s227 = sadd.s32 %s225, %s226
      %s228 = smul.addr %s227, 8
      %s229 = scalar_lea.vmem %s0, %s228
      %p230 = scmp.lt.s32.totalorder %s19, 1
      %s231 = scalar_select %p230, %s19, 1
      %p232 = scmp.lt.s32.totalorder %s20, 0
      %s233 = scalar_select %p232, %s20, 0
      %s234 = smul.addr %s231, 32
      %s235 = sadd.s32 %s233, %s234
      %s236 = smul.addr %s235, 8
      %s237 = scalar_lea.vmem %s1, %s236
      %p238 = scmp.lt.s32.totalorder %s19, 1
      %s239 = scalar_select %p238, %s19, 1
      %p240 = scmp.lt.s32.totalorder %s20, 0
      %s241 = scalar_select %p240, %s20, 0
      %s242 = smul.addr %s239, 8
      %s243 = sadd.s32 %s241, %s242
      %s244 = smul.addr %s243, 8
      %s245 = scalar_lea.vmem %s2, %s244
      %p246 = scmp.lt.s32.totalorder %s19, 1
      %s247 = scalar_select %p246, %s19, 1
      %p248 = scmp.lt.s32.totalorder %s20, 0
      %s249 = scalar_select %p248, %s20, 0
      %s250 = smul.addr %s247, 8
      %s251 = sadd.s32 %s249, %s250
      %s252 = smul.addr %s251, 8
      %s253 = scalar_lea.vmem %s3, %s252
      %v254 = vld [vmem:[%s229] sm:$0xff]
      %v255 = vld [vmem:[%s229 + $0x8] sm:$0xff]
      %v256 = vld [vmem:[%s229 + $0x10] sm:$0xff]
      %v257 = vld [vmem:[%s229 + $0x18] sm:$0xff]
      %v258 = vld [vmem:[%s229 + $0x20] sm:$0xff]
      %v259 = vld [vmem:[%s229 + $0x28] sm:$0xff]
      %v260 = vld [vmem:[%s229 + $0x30] sm:$0xff]
      %v261 = vld [vmem:[%s229 + $0x38] sm:$0xff]
      %v262 = vld [vmem:[%s237] sm:$0xff]
      %v263 = vld [vmem:[%s237 + $0x8] sm:$0xff]
      %v264 = vld [vmem:[%s237 + $0x10] sm:$0xff]
      %v265 = vld [vmem:[%s237 + $0x18] sm:$0xff]
      %v266 = vld [vmem:[%s237 + $0x20] sm:$0xff]
      %v267 = vld [vmem:[%s237 + $0x28] sm:$0xff]
      %v268 = vld [vmem:[%s237 + $0x30] sm:$0xff]
      %v269 = vld [vmem:[%s237 + $0x38] sm:$0xff]
      %s270 = scalar_lea.vmem %s229, 64
      %v271 = vld [vmem:[%s270] sm:$0xff]
      %v272 = vld [vmem:[%s270 + $0x8] sm:$0xff]
      %v273 = vld [vmem:[%s270 + $0x10] sm:$0xff]
      %v274 = vld [vmem:[%s270 + $0x18] sm:$0xff]
      %v275 = vld [vmem:[%s270 + $0x20] sm:$0xff]
      %v276 = vld [vmem:[%s270 + $0x28] sm:$0xff]
      %v277 = vld [vmem:[%s270 + $0x30] sm:$0xff]
      %v278 = vld [vmem:[%s270 + $0x38] sm:$0xff]
      %s279 = scalar_lea.vmem %s237, 64
      %v280 = vld [vmem:[%s279] sm:$0xff]
      %v281 = vld [vmem:[%s279 + $0x8] sm:$0xff]
      %v282 = vld [vmem:[%s279 + $0x10] sm:$0xff]
      %v283 = vld [vmem:[%s279 + $0x18] sm:$0xff]
      %v284 = vld [vmem:[%s279 + $0x20] sm:$0xff]
      %v285 = vld [vmem:[%s279 + $0x28] sm:$0xff]
      %v286 = vld [vmem:[%s279 + $0x30] sm:$0xff]
      %v287 = vld [vmem:[%s279 + $0x38] sm:$0xff]
      %vm288 = vcmp.gt.f32.partialorder %v271, %v254
      %vm289 = vcmp.gt.f32.partialorder %v272, %v255
      %vm290 = vcmp.gt.f32.partialorder %v273, %v256
      %vm291 = vcmp.gt.f32.partialorder %v274, %v257
      %vm292 = vcmp.gt.f32.partialorder %v275, %v258
      %vm293 = vcmp.gt.f32.partialorder %v276, %v259
      %vm294 = vcmp.gt.f32.partialorder %v277, %v260
      %vm295 = vcmp.gt.f32.partialorder %v278, %v261
      %v296 = vsel %vm288, %v271, %v254
      %v297 = vsel %vm289, %v272, %v255
      %v298 = vsel %vm290, %v273, %v256
      %v299 = vsel %vm291, %v274, %v257
      %v300 = vsel %vm292, %v275, %v258
      %v301 = vsel %vm293, %v276, %v259
      %v302 = vsel %vm294, %v277, %v260
      %v303 = vsel %vm295, %v278, %v261
      %v304 = vsel %vm288, %v280, %v262
      %v305 = vsel %vm289, %v281, %v263
      %v306 = vsel %vm290, %v282, %v264
      %v307 = vsel %vm291, %v283, %v265
      %v308 = vsel %vm292, %v284, %v266
      %v309 = vsel %vm293, %v285, %v267
      %v310 = vsel %vm294, %v286, %v268
      %v311 = vsel %vm295, %v287, %v269
      %s312 = scalar_lea.vmem %s229, 128
      %v313 = vld [vmem:[%s312] sm:$0xff]
      %v314 = vld [vmem:[%s312 + $0x8] sm:$0xff]
      %v315 = vld [vmem:[%s312 + $0x10] sm:$0xff]
      %v316 = vld [vmem:[%s312 + $0x18] sm:$0xff]
      %v317 = vld [vmem:[%s312 + $0x20] sm:$0xff]
      %v318 = vld [vmem:[%s312 + $0x28] sm:$0xff]
      %v319 = vld [vmem:[%s312 + $0x30] sm:$0xff]
      %v320 = vld [vmem:[%s312 + $0x38] sm:$0xff]
      %s321 = scalar_lea.vmem %s237, 128
      %v322 = vld [vmem:[%s321] sm:$0xff]
      %v323 = vld [vmem:[%s321 + $0x8] sm:$0xff]
      %v324 = vld [vmem:[%s321 + $0x10] sm:$0xff]
      %v325 = vld [vmem:[%s321 + $0x18] sm:$0xff]
      %v326 = vld [vmem:[%s321 + $0x20] sm:$0xff]
      %v327 = vld [vmem:[%s321 + $0x28] sm:$0xff]
      %v328 = vld [vmem:[%s321 + $0x30] sm:$0xff]
      %v329 = vld [vmem:[%s321 + $0x38] sm:$0xff]
      %vm330 = vcmp.gt.f32.partialorder %v313, %v296
      %vm331 = vcmp.gt.f32.partialorder %v314, %v297
      %vm332 = vcmp.gt.f32.partialorder %v315, %v298
      %vm333 = vcmp.gt.f32.partialorder %v316, %v299
      %vm334 = vcmp.gt.f32.partialorder %v317, %v300
      %vm335 = vcmp.gt.f32.partialorder %v318, %v301
      %vm336 = vcmp.gt.f32.partialorder %v319, %v302
      %vm337 = vcmp.gt.f32.partialorder %v320, %v303
      %v338 = vsel %vm330, %v313, %v296
      %v339 = vsel %vm331, %v314, %v297
      %v340 = vsel %vm332, %v315, %v298
      %v341 = vsel %vm333, %v316, %v299
      %v342 = vsel %vm334, %v317, %v300
      %v343 = vsel %vm335, %v318, %v301
      %v344 = vsel %vm336, %v319, %v302
      %v345 = vsel %vm337, %v320, %v303
      %v346 = vsel %vm330, %v322, %v304
      %v347 = vsel %vm331, %v323, %v305
      %v348 = vsel %vm332, %v324, %v306
      %v349 = vsel %vm333, %v325, %v307
      %v350 = vsel %vm334, %v326, %v308
      %v351 = vsel %vm335, %v327, %v309
      %v352 = vsel %vm336, %v328, %v310
      %v353 = vsel %vm337, %v329, %v311
      %s354 = scalar_lea.vmem %s229, 192
      %v355 = vld [vmem:[%s354] sm:$0xff]
      %v356 = vld [vmem:[%s354 + $0x8] sm:$0xff]
      %v357 = vld [vmem:[%s354 + $0x10] sm:$0xff]
      %v358 = vld [vmem:[%s354 + $0x18] sm:$0xff]
      %v359 = vld [vmem:[%s354 + $0x20] sm:$0xff]
      %v360 = vld [vmem:[%s354 + $0x28] sm:$0xff]
      %v361 = vld [vmem:[%s354 + $0x30] sm:$0xff]
      %v362 = vld [vmem:[%s354 + $0x38] sm:$0xff]
      %s363 = scalar_lea.vmem %s237, 192
      %v364 = vld [vmem:[%s363] sm:$0xff]
      %v365 = vld [vmem:[%s363 + $0x8] sm:$0xff]
      %v366 = vld [vmem:[%s363 + $0x10] sm:$0xff]
      %v367 = vld [vmem:[%s363 + $0x18] sm:$0xff]
      %v368 = vld [vmem:[%s363 + $0x20] sm:$0xff]
      %v369 = vld [vmem:[%s363 + $0x28] sm:$0xff]
      %v370 = vld [vmem:[%s363 + $0x30] sm:$0xff]
      %v371 = vld [vmem:[%s363 + $0x38] sm:$0xff]
      %vm372 = vcmp.gt.f32.partialorder %v355, %v338
      %vm373 = vcmp.gt.f32.partialorder %v356, %v339
      %vm374 = vcmp.gt.f32.partialorder %v357, %v340
      %vm375 = vcmp.gt.f32.partialorder %v358, %v341
      %vm376 = vcmp.gt.f32.partialorder %v359, %v342
      %vm377 = vcmp.gt.f32.partialorder %v360, %v343
      %vm378 = vcmp.gt.f32.partialorder %v361, %v344
      %vm379 = vcmp.gt.f32.partialorder %v362, %v345
      %v380 = vsel %vm372, %v355, %v338
      %v381 = vsel %vm373, %v356, %v339
      %v382 = vsel %vm374, %v357, %v340
      %v383 = vsel %vm375, %v358, %v341
      %v384 = vsel %vm376, %v359, %v342
      %v385 = vsel %vm377, %v360, %v343
      %v386 = vsel %vm378, %v361, %v344
      %v387 = vsel %vm379, %v362, %v345
      %v388 = vsel %vm372, %v364, %v346
      %v389 = vsel %vm373, %v365, %v347
      %v390 = vsel %vm374, %v366, %v348
      %v391 = vsel %vm375, %v367, %v349
      %v392 = vsel %vm376, %v368, %v350
      %v393 = vsel %vm377, %v369, %v351
      %v394 = vsel %vm378, %v370, %v352
      %v395 = vsel %vm379, %v371, %v353
      %vm396 = vcmask 31744
      %397 = vst.msk [vmem:[%s245] sm:$0xff] %vm396, %v380
      %398 = vst.msk [vmem:[%s245 + $0x8] sm:$0xff] %vm396, %v381
      %399 = vst.msk [vmem:[%s245 + $0x10] sm:$0xff] %vm396, %v382
      %400 = vst.msk [vmem:[%s245 + $0x18] sm:$0xff] %vm396, %v383
      %401 = vst.msk [vmem:[%s245 + $0x20] sm:$0xff] %vm396, %v384
      %402 = vst.msk [vmem:[%s245 + $0x28] sm:$0xff] %vm396, %v385
      %403 = vst.msk [vmem:[%s245 + $0x30] sm:$0xff] %vm396, %v386
      %404 = vst.msk [vmem:[%s245 + $0x38] sm:$0xff] %vm396, %v387
      %405 = vst.msk [vmem:[%s253] sm:$0xff] %vm396, %v388
      %406 = vst.msk [vmem:[%s253 + $0x8] sm:$0xff] %vm396, %v389
      %407 = vst.msk [vmem:[%s253 + $0x10] sm:$0xff] %vm396, %v390
      %408 = vst.msk [vmem:[%s253 + $0x18] sm:$0xff] %vm396, %v391
      %409 = vst.msk [vmem:[%s253 + $0x20] sm:$0xff] %vm396, %v392
      %410 = vst.msk [vmem:[%s253 + $0x28] sm:$0xff] %vm396, %v393
      %411 = vst.msk [vmem:[%s253 + $0x30] sm:$0xff] %vm396, %v394
      %412 = vst.msk [vmem:[%s253 + $0x38] sm:$0xff] %vm396, %v395
      %p413 = scmp.lt.s32.totalorder %s19, 1
      %s414 = scalar_select %p413, %s19, 1
      %p415 = scmp.lt.s32.totalorder %s20, 0
      %s416 = scalar_select %p415, %s20, 0
      %s417 = smul.addr %s414, 8
      %s418 = sadd.s32 %s416, %s417
      %s419 = smul.addr %s418, 8
      %s420 = scalar_lea.vmem %s2, %s419
      %p421 = scmp.lt.s32.totalorder %s19, 1
      %s422 = scalar_select %p421, %s19, 1
      %p423 = scmp.lt.s32.totalorder %s20, 0
      %s424 = scalar_select %p423, %s20, 0
      %s425 = smul.addr %s422, 8
      %s426 = sadd.s32 %s424, %s425
      %s427 = smul.addr %s426, 8
      %s428 = scalar_lea.vmem %s3, %s427
      // Predicated region
      $region29: #{tpu_custom_call.1} parent=27 // pred_check
        %p429 = pneg %p103
      $region30: #{tpu_custom_call.1} parent=27 // pred_check_branch
        %431 = sbr.rel (%p429) target = $region32
      $region31: #{tpu_custom_call.1} parent=27 // pred_region
        _
      $region32: #{tpu_custom_call.1} parent=27 // pred_fallthru
        _
      // Predicated region
      $region33: #{tpu_custom_call.1} parent=27 // pred_check
        %p432 = pneg %p131
      $region34: #{tpu_custom_call.1} parent=27 // pred_check_branch
        %434 = sbr.rel (%p432) target = $region36
      $region35: #{tpu_custom_call.1} parent=27 // pred_region
        _
      $region36: #{tpu_custom_call.1} parent=27 // pred_fallthru
        _
    $region28: #{tpu_custom_call.1} parent=5 // pred_fallthru
      _
    %p435 = scmp.le.s32.totalorder 2, %s10
    // Predicated region
    $region37: #{tpu_custom_call.1} parent=5 // pred_check
      %p436 = pneg %p435
    $region38: #{tpu_custom_call.1} parent=5 // pred_check_branch
      %438 = sbr.rel (%p436) target = $region40
    $region39: #{tpu_custom_call.1} parent=5 // pred_region
      %s439 = ssub.s32 %s10, 2
      // Predicated region
      $region41: #{tpu_custom_call.1} parent=39 // pred_check
        %p440 = pneg %p109
      $region42: #{tpu_custom_call.1} parent=39 // pred_check_branch
        %442 = sbr.rel (%p440) target = $region44
      $region43: #{tpu_custom_call.1} parent=39 // pred_region
        %p443 = scmp.lt.s32.totalorder %s21, 1
        %s444 = scalar_select %p443, %s21, 1
        %p445 = scmp.lt.s32.totalorder %s22, 0
        %s446 = scalar_select %p445, %s22, 0
        %s447 = smul.addr %s444, 8
        %s448 = sadd.s32 %s446, %s447
        %s449 = smul.addr %s448, 8
        %s450 = scalar_lea.vmem %s2, %s449
      $region44: #{tpu_custom_call.1} parent=39 // pred_fallthru
        _
      // Predicated region
      $region45: #{tpu_custom_call.1} parent=39 // pred_check
        %p451 = pneg %p137
      $region46: #{tpu_custom_call.1} parent=39 // pred_check_branch
        %453 = sbr.rel (%p451) target = $region48
      $region47: #{tpu_custom_call.1} parent=39 // pred_region
        %p454 = scmp.lt.s32.totalorder %s21, 1
        %s455 = scalar_select %p454, %s21, 1
        %p456 = scmp.lt.s32.totalorder %s22, 0
        %s457 = scalar_select %p456, %s22, 0
        %s458 = smul.addr %s455, 8
        %s459 = sadd.s32 %s457, %s458
        %s460 = smul.addr %s459, 8
        %s461 = scalar_lea.vmem %s3, %s460
      $region48: #{tpu_custom_call.1} parent=39 // pred_fallthru
        _
    $region40: #{tpu_custom_call.1} parent=5 // pred_fallthru
      _
  $region6: #{tpu_custom_call.1} parent=0 // loop_footer
    %s14 = sadd.s32 1, %s10
  $region7: #{tpu_custom_call.1} parent=0 // loop_footer_branch
    %9 = sbr.rel target = $region3
  $region8: #{tpu_custom_call.1} parent=0 // loop_exit
    _

</llo_original>
